<compile_context>
chip_gen: v5e
topology: v5e:2x2
jax: 0.10.0
libtpu: 0.0.40
codegen_flags: <defaults>
</compile_context>

<pallas_src>
import functools
import math

import jax
import jax.numpy as jnp
from jax.experimental import pallas as pl
from jax.experimental.pallas import tpu as pltpu


def _build_pe_table(d_model: int, max_len: int = 5000) -> jnp.ndarray:
    """Sinusoidal table identical to the PyTorch buffer, shape [max_len, d_model]."""
    position = jnp.arange(max_len, dtype=jnp.float32)[:, None]              # [L, 1]
    div_term = jnp.exp(
        jnp.arange(0, d_model, 2, dtype=jnp.float32)
        * (-math.log(10000.0) / d_model)
    )                                                                        # [ceil(D/2)]
    args = position * div_term                                               # [L, ceil(D/2)]
    pe = jnp.zeros((max_len, d_model), dtype=jnp.float32)
    pe = pe.at[:, 0::2].set(jnp.sin(args))
    pe = pe.at[:, 1::2].set(jnp.cos(args)[:, : d_model // 2])
    return pe                                                                # [L, D]


def _pos_enc_eval_kernel(pe_ref, x_ref, o_ref):
    # pe_ref: [TS, D], x_ref/o_ref: [TS, B, D]
    val = x_ref[...] + pe_ref[...][:, None, :]
    o_ref[...] = val.astype(o_ref.dtype)


def _pos_enc_dropout_kernel(pe_ref, x_ref, bits_ref, o_ref, *, threshold, scale):
    # pe_ref: [TS, D], x_ref/bits_ref/o_ref: [TS, B, D]
    val = x_ref[...] + pe_ref[...][:, None, :]
    # Inverted dropout via integer threshold on precomputed uniform uint32 bits:
    # P(bits >= threshold) = 1 - p.
    keep = bits_ref[...] >= jnp.uint32(threshold)
    val = jnp.where(keep, val * jnp.asarray(scale, dtype=val.dtype),
                    jnp.zeros((), dtype=val.dtype))
    o_ref[...] = val.astype(o_ref.dtype)


def _pick_seq_tile(S: int, B: int, D: int, itemsize: int) -> int:
    """Largest seq-tile whose x-block is ~<=2 MiB; multiple of 8 unless TS == S.

    3 blocks (x, bits, out) * 2 pipeline buffers * 2 MiB = 12 MiB, which fits
    even v5e's 16 MiB default scoped VMEM (v6e/v7x have 32 MiB scoped).
    """
    bytes_per_row = max(1, B * D * itemsize)
    ts = max(1, (2 * 1024 * 1024) // bytes_per_row)
    if ts >= S:
        return S
    return min(S, max(8, (ts // 8) * 8))


def positional_encoding(x, pe_table, *, dropout_p=0.1, training=True, key=None):
    """x: [S, B, D]. Returns dropout(x + pe[:S]) with the same shape/dtype."""
    S, B, D = x.shape
    if not (0.0 <= float(dropout_p) < 1.0):
        raise ValueError(f"dropout_p must be in [0, 1), got {dropout_p}")

    pe_slice = pe_table[:S].astype(x.dtype)                                  # [S, D]
    TS = _pick_seq_tile(S, B, D, jnp.dtype(x.dtype).itemsize)
    grid = (pl.cdiv(S, TS),)

    pe_spec = pl.BlockSpec((TS, D), lambda i: (i, 0))
    x_spec = pl.BlockSpec((TS, B, D), lambda i: (i, 0, 0))
    out_spec = pl.BlockSpec((TS, B, D), lambda i: (i, 0, 0))

    use_dropout = bool(training) and float(dropout_p) > 0.0
    if use_dropout:
        if key is None:
            key = jax.random.PRNGKey(0)
        bits = jax.random.bits(key, (S, B, D), dtype=jnp.uint32)
        threshold = min(int(round(float(dropout_p) * (1 << 32))), (1 << 32) - 1)
        scale = 1.0 / (1.0 - float(dropout_p))
        kernel = functools.partial(
            _pos_enc_dropout_kernel, threshold=threshold, scale=scale
        )
        in_specs = [pe_spec, x_spec, x_spec]
        args = (pe_slice, x, bits)
    else:
        kernel = _pos_enc_eval_kernel
        in_specs = [pe_spec, x_spec]
        args = (pe_slice, x)

    return pl.pallas_call(
        kernel,
        out_shape=jax.ShapeDtypeStruct((S, B, D), x.dtype),
        grid=grid,
        in_specs=in_specs,
        out_specs=out_spec,
        compiler_params=pltpu.CompilerParams(
            dimension_semantics=("parallel",),
        ),
    )(*args)


if __name__ == "__main__":
    S, B, D = 8, 2, 32          # [sequence length, batch size, embed dim]
    root = jax.random.PRNGKey(0)
    k_x, k_drop = jax.random.split(root)
    x = jax.random.normal(k_x, (S, B, D), dtype=jnp.float32)

    pe_table = _build_pe_table(D, max_len=5000)
    ref = x + pe_table[:S][:, None, :]

    # Eval-mode forward (deterministic) — must match pure-JAX reference.
    out_eval = positional_encoding(x, pe_table, dropout_p=0.1, training=False)
    out_eval = jax.block_until_ready(out_eval)
    assert out_eval.shape == (S, B, D)
    assert jnp.allclose(out_eval, ref, atol=1e-6), "eval-mode mismatch vs reference"

    # Training-mode forward (stochastic inverted dropout).
    p = 0.1
    out_train = positional_encoding(x, pe_table, dropout_p=p, training=True, key=k_drop)
    out_train = jax.block_until_ready(out_train)
    assert out_train.shape == (S, B, D)

    # Kept elements must equal (x + pe) / (1 - p); dropped elements are exactly 0.
    kept = out_train != 0.0
    assert jnp.allclose(out_train[kept], (ref / (1.0 - p))[kept], rtol=1e-5, atol=1e-5)
    drop_frac = 1.0 - float(kept.mean())
    assert 0.0 <= drop_frac <= 0.4, f"implausible dropout fraction {drop_frac}"

    print("KERNEL_OK")
</pallas_src>

<mosaic_0001>
module attributes {stable_mosaic.version = 11 : i64} {
  func.func @_pos_enc_eval_kernel(%arg0: i32, %arg1: memref<8x32xf32, #tpu.memory_space<vmem>>, %arg2: memref<8x2x32xf32, #tpu.memory_space<vmem>>, %arg3: memref<8x2x32xf32, #tpu.memory_space<vmem>>) attributes {dimension_semantics = [#tpu.dimension_semantics<parallel>], iteration_bounds = array<i64: 1>, scalar_prefetch = 0 : i64, scratch_operands = 0 : i64, tpu.core_type = #tpu.core_type<tc>, window_params = [{transform_indices = @transform_0, window_bounds = array<i64: 8, 32>}, {transform_indices = @transform_1, window_bounds = array<i64: 8, 2, 32>}, {transform_indices = @transform_2, window_bounds = array<i64: 8, 2, 32>}]} {
    %c0 = arith.constant 0 : index
    %c0_0 = arith.constant 0 : index
    %c0_1 = arith.constant 0 : index
    %0 = vector.load %arg2[%c0, %c0_0, %c0_1] : memref<8x2x32xf32, #tpu.memory_space<vmem>>, vector<8x2x32xf32>
    %c0_2 = arith.constant 0 : index
    %c0_3 = arith.constant 0 : index
    %1 = vector.load %arg1[%c0_2, %c0_3] : memref<8x32xf32, #tpu.memory_space<vmem>>, vector<8x32xf32>
    %2 = vector.shape_cast %1 : vector<8x32xf32> to vector<8x1x32xf32>
    %3 = vector.broadcast %2 : vector<8x1x32xf32> to vector<8x2x32xf32>
    %4 = arith.addf %0, %3 : vector<8x2x32xf32>
    %c0_4 = arith.constant 0 : index
    %c0_5 = arith.constant 0 : index
    %c0_6 = arith.constant 0 : index
    %5 = vector.load %arg3[%c0_4, %c0_5, %c0_6] : memref<8x2x32xf32, #tpu.memory_space<vmem>>, vector<8x2x32xf32>
    tpu.vector_store %arg3[%c0_4, %c0_5, %c0_6], %4 {strides = array<i32>} : memref<8x2x32xf32, #tpu.memory_space<vmem>>, vector<8x2x32xf32>,
    return
  }
  func.func @transform_0(%arg0: i32) -> (i32, i32) {
    %c0_i32 = arith.constant 0 : i32
    %c0_i32_0 = arith.constant 0 : i32
    return %arg0, %c0_i32 : i32, i32
  }
  func.func @transform_1(%arg0: i32) -> (i32, i32, i32) {
    %c0_i32 = arith.constant 0 : i32
    %c0_i32_0 = arith.constant 0 : i32
    %c0_i32_1 = arith.constant 0 : i32
    return %arg0, %c0_i32, %c0_i32_0 : i32, i32, i32
  }
  func.func @transform_2(%arg0: i32) -> (i32, i32, i32) {
    %c0_i32 = arith.constant 0 : i32
    %c0_i32_0 = arith.constant 0 : i32
    %c0_i32_1 = arith.constant 0 : i32
    return %arg0, %c0_i32, %c0_i32_0 : i32, i32, i32
  }
}

</mosaic_0001>

<llo_original>
// kernel: tpu_custom_call.1
$region0: #{tpu_custom_call.1}
  #allocation0 [shape = 'u32[]', space=smem, size = 0x4, offset = 0x4, fixed_abs, tag = 'smem constant byte address 0x4 - core index']
  #allocation1 [shape = 'u32[72,128]{1,0:T(1,128)}', space=vmem, size = 0x9000, scoped, tag = 'internal scratch']
  %s0 = inlined_call_operand.hbm [shape: f32[8,32], index: 0, kind: input, shape index: {}]
  %s1 = inlined_call_operand.hbm [shape: f32[8,2,32], index: 1, kind: input, shape index: {}]
  %s2 = inlined_call_operand.hbm [shape: f32[8,2,32], index: 2, kind: output, shape index: {}]
  %s3 = sld [smem:[#allocation0]]
  $region26: #{tpu_custom_call.1} parent=0
    _
  %s5 = ssub.s32 1, %s3
  %s6 = scalar_select 0, %s5, %s3
  $region1: #{tpu_custom_call.1} parent=0
    #allocation2 [shape = 'u8[4096]{0}', space=vmem, size = 0x1000, scoped, tag = 'input window, operand 0, single buffered']
    #allocation3 [shape = 's32[1]{0}', space=sflag, size = 0x4, scoped, tag = 'scoped memory for tpu_custom_call.1']
    #allocation4 [shape = 's32[1]{0}', space=sflag, size = 0x4, scoped, tag = 'scoped memory for tpu_custom_call.1']
    #allocation5 [shape = 'u8[8192]{0}', space=vmem, size = 0x2000, scoped, tag = 'input window, operand 1, single buffered']
    #allocation6 [shape = 's32[1]{0}', space=sflag, size = 0x4, scoped, tag = 'scoped memory for tpu_custom_call.1']
    #allocation7 [shape = 'u8[8192]{0}', space=vmem, size = 0x2000, scoped, tag = 'output window, operand 0, single buffered']
    %7 = vsyncpa [#allocation3], 0
    %8 = vsyncpa [#allocation6], 0
    %9 = vsyncpa [#allocation4], 0
    // Predicated region
    $region2: #{tpu_custom_call.1} parent=1 // pred_check
      _
    $region3: #{tpu_custom_call.1} parent=1 // pred_check_branch
      %11 = sbr.rel (0) target = $region5
    $region4: #{tpu_custom_call.1} parent=1 // pred_region
      %13 = vsyncadd [#allocation3], 0
      %s15 = sshll.u32 %s0, 4
      %s16 = int_to_ptr.hbm [resolvable:$true] %s15
      %s17 = sshll.u32 [#allocation2], 4
      %s18 = int_to_ptr.vmem [resolvable:$true] %s17
      %20 = dma.hbm_to_vmem [thread:$0]  %s16, 128, %s18, [#allocation3]
    $region5: #{tpu_custom_call.1} parent=1 // pred_fallthru
      _
    // Predicated region
    $region6: #{tpu_custom_call.1} parent=1 // pred_check
      _
    $region7: #{tpu_custom_call.1} parent=1 // pred_check_branch
      %22 = sbr.rel (0) target = $region9
    $region8: #{tpu_custom_call.1} parent=1 // pred_region
      %24 = vsyncadd [#allocation6], 0
      %s25 = sshll.u32 %s1, 4
      %s26 = int_to_ptr.hbm [resolvable:$true] %s25
      %s27 = sshll.u32 [#allocation5], 4
      %s28 = int_to_ptr.vmem [resolvable:$true] %s27
      %33 = dma.hbm_to_vmem [thread:$0]  %s26, 256, %s28, [#allocation6], 32, 32, 2
    $region9: #{tpu_custom_call.1} parent=1 // pred_fallthru
      _
    // Predicated region
    $region10: #{tpu_custom_call.1} parent=1 // pred_check
      _
    $region11: #{tpu_custom_call.1} parent=1 // pred_check_branch
      %35 = sbr.rel (0) target = $region13
    $region12: #{tpu_custom_call.1} parent=1 // pred_region
      %37 = dma.done [#allocation3], 128
    $region13: #{tpu_custom_call.1} parent=1 // pred_fallthru
      _
    // Predicated region
    $region14: #{tpu_custom_call.1} parent=1 // pred_check
      _
    $region15: #{tpu_custom_call.1} parent=1 // pred_check_branch
      %39 = sbr.rel (0) target = $region17
    $region16: #{tpu_custom_call.1} parent=1 // pred_region
      %41 = dma.done [#allocation6], 256
    $region17: #{tpu_custom_call.1} parent=1 // pred_fallthru
      _
    %v42 = vld [vmem:[#allocation5] sm:$0x3]
    %v43 = vld [vmem:[#allocation5 + $0x2] sm:$0x3]
    %v44 = vld [vmem:[#allocation5 + $0x4] sm:$0x3]
    %v45 = vld [vmem:[#allocation5 + $0x6] sm:$0x3]
    %v46 = vld [vmem:[#allocation5 + $0x8] sm:$0x3]
    %v47 = vld [vmem:[#allocation5 + $0xa] sm:$0x3]
    %v48 = vld [vmem:[#allocation5 + $0xc] sm:$0x3]
    %v49 = vld [vmem:[#allocation5 + $0xe] sm:$0x3]
    %v50 = vld [vmem:[#allocation2] sm:$0xff]
    %v52 = vrot.slane %v50, 1
    %v53 = vrot.slane %v50, 2
    %v54 = vrot.slane %v50, 3
    %v55 = vrot.slane %v50, 4
    %v56 = vrot.slane %v50, 5
    %v57 = vrot.slane %v50, 6
    %v58 = vrot.slane %v50, 7
    %v59 = vperm.slane %v50, 0
    %v60 = vperm.slane %v52, 0
    %v61 = vperm.slane %v53, 0
    %v62 = vperm.slane %v54, 0
    %v63 = vperm.slane %v55, 0
    %v64 = vperm.slane %v56, 0
    %v65 = vperm.slane %v57, 0
    %v66 = vperm.slane %v58, 0
    %v75 = vadd.f32 %v42, %v59
    %v76 = vadd.f32 %v43, %v60
    %v77 = vadd.f32 %v44, %v61
    %v78 = vadd.f32 %v45, %v62
    %v79 = vadd.f32 %v46, %v63
    %v80 = vadd.f32 %v47, %v64
    %v81 = vadd.f32 %v48, %v65
    %v82 = vadd.f32 %v49, %v66
    %vm83 = vcmask 254976
    %84 = vst.msk [vmem:[#allocation7] sm:$0x3] %vm83, %v75
    %85 = vst.msk [vmem:[#allocation7 + $0x2] sm:$0x3] %vm83, %v76
    %86 = vst.msk [vmem:[#allocation7 + $0x4] sm:$0x3] %vm83, %v77
    %87 = vst.msk [vmem:[#allocation7 + $0x6] sm:$0x3] %vm83, %v78
    %88 = vst.msk [vmem:[#allocation7 + $0x8] sm:$0x3] %vm83, %v79
    %89 = vst.msk [vmem:[#allocation7 + $0xa] sm:$0x3] %vm83, %v80
    %90 = vst.msk [vmem:[#allocation7 + $0xc] sm:$0x3] %vm83, %v81
    %91 = vst.msk [vmem:[#allocation7 + $0xe] sm:$0x3] %vm83, %v82
    // Predicated region
    $region18: #{tpu_custom_call.1} parent=1 // pred_check
      _
    $region19: #{tpu_custom_call.1} parent=1 // pred_check_branch
      %93 = sbr.rel (0) target = $region21
    $region20: #{tpu_custom_call.1} parent=1 // pred_region
      %95 = vsyncadd [#allocation4], 0
      %s96 = sshll.u32 [#allocation7], 4
      %s97 = int_to_ptr.vmem [resolvable:$true] %s96
      %s98 = sshll.u32 %s2, 4
      %s99 = int_to_ptr.hbm [resolvable:$true] %s98
      %104 = dma.vmem_to_hbm [thread:$0]  %s97, 256, %s99, [#allocation4], 32, 32, 2
    $region21: #{tpu_custom_call.1} parent=1 // pred_fallthru
      _
    // Predicated region
    $region22: #{tpu_custom_call.1} parent=1 // pred_check
      _
    $region23: #{tpu_custom_call.1} parent=1 // pred_check_branch
      %106 = sbr.rel (0) target = $region25
    $region24: #{tpu_custom_call.1} parent=1 // pred_region
      %108 = dma.done [#allocation4], 256
    $region25: #{tpu_custom_call.1} parent=1 // pred_fallthru
      _
    %109 = vsyncpa [#allocation3], 1
    %110 = vsyncpa [#allocation6], 1
    %111 = vsyncpa [#allocation4], 1

</llo_original>
